<compile_context>
chip_gen: v7x
topology: tpu7x:2x2x1
jax: 0.10.0
libtpu: 0.0.40
codegen_flags: <defaults>
</compile_context>

<pallas_src>
import jax
import jax.numpy as jnp
from jax.experimental import pallas as pl
from jax.experimental.pallas import tpu as pltpu

_MIB = 1024 * 1024
# Double-buffered tile budget that is safe on every generation:
# v7x has 64 MiB physical VMEM (32 MiB default scoped); v5e/v6e have 128 MiB.
_VMEM_BUDGET = 48 * _MIB
_VMEM_CAP = 56 * _MIB


def _rmsnorm_kernel(h_ref, gamma_ref, o_ref):
  """RMSNorm over the full hidden dim; bf16 in, f32 stats, bf16 out."""
  h = h_ref[...].astype(jnp.float32)                     # (TM, D) f32
  var = jnp.mean(h * h, axis=-1, keepdims=True)          # (TM, 1) f32
  hn = h * jax.lax.rsqrt(var + 1e-6) * gamma_ref[...]    # (TM, D) f32
  o_ref[...] = hn.astype(o_ref.dtype)                    # -> bf16


def _lm_head_kernel(hn_ref, w_ref, o_ref):
  """One (TM, TN) logits tile = (TM, D) bf16 @ (D, TN) bf16, f32 accumulate."""
  o_ref[...] = jnp.dot(hn_ref[...], w_ref[...],
                       preferred_element_type=jnp.float32)


def _choose_tile(dim, target, aligns=(256, 128, 8)):
  """Largest tile <= target that divides dim and is a multiple of one of the
  preferred alignments (tried in order); falls back to the full dimension."""
  if dim <= target:
    return dim
  for align in aligns:
    if dim % align:
      continue
    t = min(target, dim)
    t -= t % align
    while t >= align and dim % t:
      t -= align
    if t >= align and dim % t == 0:
      return t
  return dim  # non-divisible edge case: single full-extent block


def lm_forward(tokens, embed_table, gamma, w_out,
               *, tm_target=256, tn_target=1024, tm_rms_target=1024):
  """tokens (1, T) int32 -> logits (1, T, V) f32.

  `embed_table` and `w_out` are expected to already be bf16: cast them ONCE at
  model-load time, not inside the per-call forward (hoisted per review).
  """
  assert tokens.shape[0] == 1, "batch_size must be 1 (verifier contract)"
  T = tokens.shape[1]
  D = embed_table.shape[1]
  V = w_out.shape[1]
  gamma = gamma.reshape(1, D).astype(jnp.float32)

  # Glue: embedding gather in plain JAX; kept bf16 so the (T, D) intermediate
  # HBM round trip is half the size. RMSNorm upcasts to f32 for its stats.
  # TODO(synk): fuse the gather into the RMSNorm kernel (scalar-prefetched
  # token ids + pl.Element(1) row BlockSpec) to remove the round trip entirely.
  hidden = jnp.take(embed_table, tokens[0], axis=0)      # (T, D) bf16

  # --- tile selection ------------------------------------------------------
  # Matmul seq tile: prefer 256 rows (fills the 2x256x256 MXU on v6e/v7x).
  tm = _choose_tile(T, tm_target, aligns=(256, 128, 16, 8))
  # RMSNorm is memory-bound: decouple it and use a larger seq tile.
  tm_rms = _choose_tile(T, tm_rms_target, aligns=(256, 128, 16, 8))
  # Vocab tile: lane-dense, 256-aligned when possible (128 fallback).
  tn = _choose_tile(V, tn_target, aligns=(256, 128))

  def head_bytes(tm_, tn_):
    # double-buffered hn tile + W tile + out tile
    return 2 * (tm_ * D * 2 + D * tn_ * 2 + tm_ * tn_ * 4)

  # Shrink tiles until the double-buffered footprint fits the v7x-safe budget
  # (halving a divisor preserves divisibility of the full dimension).
  while head_bytes(tm, tn) > _VMEM_BUDGET and tn > 256 and (tn // 2) % 128 == 0:
    tn //= 2
  while head_bytes(tm, tn) > _VMEM_BUDGET and tm > 16 and (tm // 2) % 8 == 0:
    tm //= 2

  # vmem_limit = actual footprint + headroom (never clamped below footprint).
  vmem_head = int(min(max(head_bytes(tm, tn) + 4 * _MIB, 16 * _MIB), _VMEM_CAP))
  rms_bytes = 4 * tm_rms * D * 2 + 2 * D * 4
  vmem_rms = int(min(max(rms_bytes + 4 * _MIB, 16 * _MIB), _VMEM_CAP))

  # --- kernel 1: RMSNorm (once per row, hoisted out of the vocab loop) ------
  hn = pl.pallas_call(
      _rmsnorm_kernel,
      out_shape=jax.ShapeDtypeStruct((T, D), jnp.bfloat16),
      grid=(T // tm_rms,),
      in_specs=[
          pl.BlockSpec((tm_rms, D), lambda i: (i, 0)),
          pl.BlockSpec((1, D), lambda i: (0, 0)),        # gamma stays resident
      ],
      out_specs=pl.BlockSpec((tm_rms, D), lambda i: (i, 0)),
      compiler_params=pltpu.CompilerParams(
          dimension_semantics=("parallel",),
          vmem_limit_bytes=vmem_rms),
      cost_estimate=pl.CostEstimate(
          flops=4 * T * D,
          transcendentals=T,
          bytes_accessed=2 * T * D * 2 + D * 4),
  )(hidden, gamma)

  # --- kernel 2: LM head, vocab-OUTER / seq-INNER grid ----------------------
  # With j (vocab) as the slow axis, the (D, tn) W tile's block index is
  # constant across all inner seq steps, so W streams from HBM exactly once;
  # only the small (tm, D) hn tile is re-fetched per step.
  logits = pl.pallas_call(
      _lm_head_kernel,
      out_shape=jax.ShapeDtypeStruct((T, V), jnp.float32),
      grid=(V // tn, T // tm),
      in_specs=[
          pl.BlockSpec((tm, D), lambda j, i: (i, 0)),    # hn: small, cheap
          pl.BlockSpec((D, tn), lambda j, i: (0, j)),    # W: resident per j
      ],
      out_specs=pl.BlockSpec((tm, tn), lambda j, i: (i, j)),  # lane-dense f32
      compiler_params=pltpu.CompilerParams(
          dimension_semantics=("parallel", "parallel"),
          vmem_limit_bytes=vmem_head),
      cost_estimate=pl.CostEstimate(
          flops=2 * T * D * V,
          transcendentals=0,
          bytes_accessed=T * D * 2 + D * V * 2 + T * V * 4),
  )(hn, w_out)

  return logits[None, :, :]  # (1, T, V)


if __name__ == "__main__":
  key = jax.random.PRNGKey(0)
  k_emb, k_gamma, k_w, k_tok = jax.random.split(key, 4)

  # Small, deterministic synthetic "checkpoint" with TPU-friendly alignment.
  vocab_size = 512
  hidden_dim = 128
  kv_cache_max_len = 32   # seq length the wrapper forwards

  embed_f32 = jax.random.normal(k_emb, (vocab_size, hidden_dim),
                                dtype=jnp.float32) * 0.02
  gamma = (jnp.ones((hidden_dim,), dtype=jnp.float32)
           + 0.01 * jax.random.normal(k_gamma, (hidden_dim,),
                                      dtype=jnp.float32))
  w_f32 = jax.random.normal(k_w, (hidden_dim, vocab_size),
                            dtype=jnp.float32) * 0.02

  # "Load-time" casts: done ONCE here, not inside the per-call forward.
  embed_bf16 = embed_f32.astype(jnp.bfloat16)
  w_bf16 = w_f32.astype(jnp.bfloat16)

  tokens = jax.random.randint(k_tok, (1, kv_cache_max_len), 0, vocab_size,
                              dtype=jnp.int32)

  # Small tile targets so the toy shapes exercise the tiled grid
  # (LM-head grid = (V//256, T//16) = (2, 2)); deployments keep the defaults.
  logits = lm_forward(tokens, embed_bf16, gamma, w_bf16,
                      tm_target=16, tn_target=256, tm_rms_target=32)
  jax.block_until_ready(logits)

  assert logits.shape == (1, kv_cache_max_len, vocab_size)
  assert logits.dtype == jnp.float32

  # Numerical sanity vs a pure-JAX reference (bf16 hn/W => loose tolerance).
  hidden = jnp.take(embed_bf16, tokens[0], axis=0).astype(jnp.float32)
  var = jnp.mean(hidden * hidden, axis=-1, keepdims=True)
  hn_ref = hidden * jax.lax.rsqrt(var + 1e-6) * gamma[None, :]
  ref = hn_ref @ w_f32
  assert jnp.max(jnp.abs(logits[0] - ref)) < 5e-2

  print("KERNEL_OK")
</pallas_src>

<mosaic_0001>
module attributes {stable_mosaic.version = 11 : i64} {
  func.func @_rmsnorm_kernel(%arg0: i32, %arg1: memref<32x128xbf16, #tpu.memory_space<vmem>>, %arg2: memref<1x128xf32, #tpu.memory_space<vmem>>, %arg3: memref<32x128xbf16, #tpu.memory_space<vmem>>) attributes {dimension_semantics = [#tpu.dimension_semantics<parallel>], iteration_bounds = array<i64: 1>, scalar_prefetch = 0 : i64, scratch_operands = 0 : i64, tpu.core_type = #tpu.core_type<tc>, window_params = [{transform_indices = @transform_0, window_bounds = array<i64: 32, 128>}, {pipeline_mode = #tpu.pipeline_mode<synchronous>, transform_indices = @transform_1, window_bounds = array<i64: 1, 128>}, {transform_indices = @transform_2, window_bounds = array<i64: 32, 128>}]} {
    %c0 = arith.constant 0 : index
    %c0_0 = arith.constant 0 : index
    %0 = vector.load %arg1[%c0, %c0_0] : memref<32x128xbf16, #tpu.memory_space<vmem>>, vector<32x128xbf16>
    %1 = arith.extf %0 : vector<32x128xbf16> to vector<32x128xf32>
    %2 = arith.mulf %1, %1 : vector<32x128xf32>
    %cst = arith.constant dense<0.000000e+00> : vector<32xf32>
    %3 = vector.multi_reduction <add>, %2, %cst [1] : vector<32x128xf32> to vector<32xf32>
    %4 = vector.shape_cast %3 : vector<32xf32> to vector<32x1xf32>
    %cst_1 = arith.constant 1.280000e+02 : f32
    %5 = vector.broadcast %cst_1 : f32 to vector<32x1xf32>
    %6 = arith.divf %4, %5 : vector<32x1xf32>
    %cst_2 = arith.constant 9.99999997E-7 : f32
    %7 = vector.broadcast %cst_2 : f32 to vector<32x1xf32>
    %8 = arith.addf %6, %7 : vector<32x1xf32>
    %9 = math.rsqrt %8 : vector<32x1xf32>
    %10 = vector.broadcast %9 : vector<32x1xf32> to vector<32x128xf32>
    %11 = arith.mulf %1, %10 : vector<32x128xf32>
    %c0_3 = arith.constant 0 : index
    %c0_4 = arith.constant 0 : index
    %12 = vector.load %arg2[%c0_3, %c0_4] : memref<1x128xf32, #tpu.memory_space<vmem>>, vector<1x128xf32>
    %13 = vector.broadcast %12 : vector<1x128xf32> to vector<32x128xf32>
    %14 = arith.mulf %11, %13 : vector<32x128xf32>
    %15 = arith.truncf %14 : vector<32x128xf32> to vector<32x128xbf16>
    %c0_5 = arith.constant 0 : index
    %c0_6 = arith.constant 0 : index
    %16 = vector.load %arg3[%c0_5, %c0_6] : memref<32x128xbf16, #tpu.memory_space<vmem>>, vector<32x128xbf16>
    tpu.vector_store %arg3[%c0_5, %c0_6], %15 {strides = array<i32>} : memref<32x128xbf16, #tpu.memory_space<vmem>>, vector<32x128xbf16>,
    return
  }
  func.func @transform_0(%arg0: i32) -> (i32, i32) {
    %c0_i32 = arith.constant 0 : i32
    %c0_i32_0 = arith.constant 0 : i32
    return %arg0, %c0_i32 : i32, i32
  }
  func.func @transform_1(%arg0: i32) -> (i32, i32) {
    %c0_i32 = arith.constant 0 : i32
    %c0_i32_0 = arith.constant 0 : i32
    %c0_i32_1 = arith.constant 0 : i32
    return %c0_i32, %c0_i32_0 : i32, i32
  }
  func.func @transform_2(%arg0: i32) -> (i32, i32) {
    %c0_i32 = arith.constant 0 : i32
    %c0_i32_0 = arith.constant 0 : i32
    return %arg0, %c0_i32 : i32, i32
  }
}

</mosaic_0001>

<llo_original>
// kernel: tpu_custom_call.1
$region0: #{tpu_custom_call.1}
  #allocation0 [shape = 'u32[]', space=smem, size = 0x4, offset = 0x4, fixed_abs, tag = 'smem constant byte address 0x4 - core index']
  #allocation1 [shape = 'u32[144,128]{1,0:T(1,128)}', space=vmem, size = 0x12000, scoped, tag = 'internal scratch']
  %s0 = inlined_call_operand.hbm [shape: bf16[32,128], index: 0, kind: input, shape index: {}]
  %s1 = inlined_call_operand.vmem [shape: f32[1,128], index: 1, kind: input, shape index: {}]
  %s2 = inlined_call_operand.hbm [shape: bf16[32,128], index: 2, kind: output, shape index: {}]
  %s3 = sld [smem:[#allocation0]]
  $region22: #{tpu_custom_call.1} parent=0
    _
  %s5 = ssub.s32 1, %s3
  %s6 = scalar_select 0, %s5, %s3
  $region1: #{tpu_custom_call.1} parent=0
    #allocation2 [shape = 'u8[8192]{0}', space=vmem, size = 0x2000, scoped, tag = 'input window, operand 0, single buffered']
    #allocation3 [shape = 's32[1]{0}', space=sflag, size = 0x4, scoped, tag = 'scoped memory for tpu_custom_call.1']
    #allocation4 [shape = 's32[1]{0}', space=sflag, size = 0x4, scoped, tag = 'scoped memory for tpu_custom_call.1']
    #allocation5 [shape = 'u8[8192]{0}', space=vmem, size = 0x2000, scoped, tag = 'output window, operand 0, single buffered']
    %7 = vsyncpa [#allocation3], 0
    %8 = vsyncpa [#allocation4], 0
    // Predicated region
    $region2: #{tpu_custom_call.1} parent=1 // pred_check
      _
    $region3: #{tpu_custom_call.1} parent=1 // pred_check_branch
      %10 = sbr.rel (0) target = $region5
    $region4: #{tpu_custom_call.1} parent=1 // pred_region
      %s12 = ssub.s32 256, 256
      %13 = vsyncadd [#allocation3], %s12
      %s14 = sshll.u32 [#allocation2], 4
      %s15 = int_to_ptr.vmem [resolvable:$true] %s14
      %20 = dma.hbm_to_vmem [thread:$0]  %s0, 256, %s15, [#allocation3], 64, 64, 4
    $region5: #{tpu_custom_call.1} parent=1 // pred_fallthru
      _
    // Predicated region
    $region6: #{tpu_custom_call.1} parent=1 // pred_check
      _
    $region7: #{tpu_custom_call.1} parent=1 // pred_check_branch
      %22 = sbr.rel (0) target = $region9
    $region8: #{tpu_custom_call.1} parent=1 // pred_region
      _
    $region9: #{tpu_custom_call.1} parent=1 // pred_fallthru
      _
    // Predicated region
    $region10: #{tpu_custom_call.1} parent=1 // pred_check
      _
    $region11: #{tpu_custom_call.1} parent=1 // pred_check_branch
      %24 = sbr.rel (0) target = $region13
    $region12: #{tpu_custom_call.1} parent=1 // pred_region
      %25 = dma.done [#allocation3], 256
    $region13: #{tpu_custom_call.1} parent=1 // pred_fallthru
      _
    %v26 = vld [vmem:[#allocation2] sm:$0xf]
    %v27 = vld [vmem:[#allocation2 + $0x4] sm:$0xf]
    %v28 = vld [vmem:[#allocation2 + $0x8] sm:$0xf]
    %v29 = vld [vmem:[#allocation2 + $0xc] sm:$0xf]
    %v30 = vunpack.c.l.bf16 %v26
    %v31 = vunpack.c.l.bf16 %v27
    %v32 = vunpack.c.l.bf16 %v28
    %v33 = vunpack.c.l.bf16 %v29
    %v34 = vmul.f32 %v30, %v30
    %v35 = vmul.f32 %v31, %v31
    %v36 = vmul.f32 %v32, %v32
    %v37 = vmul.f32 %v33, %v33
    %38 = vadd.xlane.f32.xlu0 %v34
    %v39 = vpop.xlane.xlu0 %38
    %40 = vadd.xlane.f32.xlu0 %v35
    %v41 = vpop.xlane.xlu0 %40
    %42 = vadd.xlane.f32.xlu0 %v36
    %v43 = vpop.xlane.xlu0 %42
    %44 = vadd.xlane.f32.xlu0 %v37
    %v45 = vpop.xlane.xlu0 %44
    %v46 = vrcp.pop 128.0
    %v47 = vmul.f32 %v39, %v46
    %v48 = vmul.f32 %v41, %v46
    %v49 = vmul.f32 %v43, %v46
    %v50 = vmul.f32 %v45, %v46
    %v51 = vadd.f32 %v47, 1e-06
    %v52 = vadd.f32 %v48, 1e-06
    %v53 = vadd.f32 %v49, 1e-06
    %v54 = vadd.f32 %v50, 1e-06
    %v55 = vrsqrt.pop %v51
    %v56 = vrsqrt.pop %v52
    %v57 = vrsqrt.pop %v53
    %v58 = vrsqrt.pop %v54
    %v59 = vmul.f32 %v30, %v55
    %v60 = vmul.f32 %v31, %v56
    %v61 = vmul.f32 %v32, %v57
    %v62 = vmul.f32 %v33, %v58
    %v63 = vld [vmem:[%s1] sm:$0x1]
    %v65 = vlaneseq
    %v66 = vshrl.u32 %v65, 7
    %v67 = vsub.s32 0, %v66
    %v68 = vrot.slane %v63, %v67
    %v70 = vmul.f32 %v59, %v68
    %v71 = vmul.f32 %v60, %v68
    %v72 = vmul.f32 %v61, %v68
    %v73 = vmul.f32 %v62, %v68
    %v74 = vpack.c.bf16 %v71, %v70
    %v75 = vpack.c.bf16 %v73, %v72
    %v78 = vunpack.c.l.b16 %v74
    %v79 = vunpack.c.h.b16 %v74
    %v80 = vunpack.c.l.b16 %v75
    %v81 = vunpack.c.h.b16 %v75
    %v82 = vpack.c.b16 %v78, %v78
    %v83 = vpack.c.b16 %v79, %v79
    %v84 = vpack.c.b16 %v80, %v80
    %v85 = vpack.c.b16 %v81, %v81
    %90 = vst [vmem:[#allocation5] sm:$0xf] %v82
    %91 = vst [vmem:[#allocation5 + $0x4] sm:$0xf] %v83
    %92 = vst [vmem:[#allocation5 + $0x8] sm:$0xf] %v84
    %93 = vst [vmem:[#allocation5 + $0xc] sm:$0xf] %v85
    // Predicated region
    $region14: #{tpu_custom_call.1} parent=1 // pred_check
      _
    $region15: #{tpu_custom_call.1} parent=1 // pred_check_branch
      %95 = sbr.rel (0) target = $region17
    $region16: #{tpu_custom_call.1} parent=1 // pred_region
      %s97 = ssub.s32 256, 256
      %98 = vsyncadd [#allocation4], %s97
      %s99 = sshll.u32 [#allocation5], 4
      %s100 = int_to_ptr.vmem [resolvable:$true] %s99
      %105 = dma.vmem_to_hbm [thread:$0]  %s100, 256, %s2, [#allocation4], 64, 64, 4
    $region17: #{tpu_custom_call.1} parent=1 // pred_fallthru
      _
    // Predicated region
    $region18: #{tpu_custom_call.1} parent=1 // pred_check
      _
    $region19: #{tpu_custom_call.1} parent=1 // pred_check_branch
      %107 = sbr.rel (0) target = $region21
    $region20: #{tpu_custom_call.1} parent=1 // pred_region
      %108 = dma.done [#allocation4], 256
    $region21: #{tpu_custom_call.1} parent=1 // pred_fallthru
      _
    %109 = vsyncpa [#allocation3], 1
    %110 = vsyncpa [#allocation4], 1

</llo_original>
